<compile_context>
chip_gen: v6e
topology: v6e:2x2x1
jax: 0.10.0
libtpu: 0.0.40
codegen_flags: <defaults>
</compile_context>

<pallas_src>
import jax
import jax.numpy as jnp
from jax.experimental import pallas as pl
from jax.experimental.pallas import tpu as pltpu

LEAKY_SLOPE = 0.01   # nn.LeakyReLU default
BN_EPS = 1e-5        # nn.BatchNorm1d default
KSIZE = 5
PAD = 2


# ---------------------------------------------------------------------------
# Fused kernel: all conv+BN+LeakyReLU layers + flatten + fc in one pallas_call
# ---------------------------------------------------------------------------
def _make_fused_kernel(num_layers, batch, seq_len):
    B, L, K = batch, seq_len, KSIZE

    def kernel(*refs):
        # refs = (x, [w, gamma, beta] * num_layers, fc_w, fc_b, out,
        #         im2col scratch per layer..., flatten scratch)
        x_ref = refs[0]
        layer_refs = refs[1:1 + 3 * num_layers]
        fcw_ref = refs[1 + 3 * num_layers]
        fcb_ref = refs[2 + 3 * num_layers]
        o_ref = refs[3 + 3 * num_layers]
        im_scrs = refs[4 + 3 * num_layers: 4 + 3 * num_layers + num_layers]
        flat_scr = refs[-1]

        # Per-batch activations, shape (L, C): channels on the lane axis.
        acts = [x_ref[b].astype(jnp.float32) for b in range(B)]

        for i in range(num_layers):
            w_ref = layer_refs[3 * i]        # (K*Cin, Cout), row = k*Cin + c
            g_ref = layer_refs[3 * i + 1]    # (1, Cout)
            be_ref = layer_refs[3 * i + 2]   # (1, Cout)
            im_ref = im_scrs[i]              # (B*L, K*Cin) VMEM scratch
            cin = w_ref.shape[0] // K

            # In-kernel zero padding along the sequence axis (no HBM jnp.pad).
            zpad = jnp.zeros((PAD, cin), jnp.float32)
            a_pads = [jnp.concatenate([zpad, acts[b], zpad], axis=0)  # (L+2P, Cin)
                      for b in range(B)]

            # Assemble im2col slab: column block k holds x_pad[l + k] for all (b, l).
            for k in range(K):
                shifted = jnp.concatenate([ap[k:k + L, :] for ap in a_pads],
                                          axis=0)                    # (B*L, Cin)
                im_ref[:, k * cin:(k + 1) * cin] = shifted

            # Whole conv layer as ONE MXU matmul: (B*L, K*Cin) x (K*Cin, Cout).
            y = jnp.dot(im_ref[...], w_ref[...],
                        preferred_element_type=jnp.float32)          # (B*L, Cout)
            # NOTE: conv bias omitted on purpose — a per-channel constant is removed
            # exactly by the training-mode BatchNorm mean subtraction below.

            # BatchNorm1d (training mode): biased stats over (batch, length) per channel.
            mean = jnp.mean(y, axis=0, keepdims=True)
            var = jnp.mean(jnp.square(y - mean), axis=0, keepdims=True)
            yhat = (y - mean) * jax.lax.rsqrt(var + BN_EPS) * g_ref[...] + be_ref[...]

            # LeakyReLU
            act_all = jnp.where(yhat >= 0, yhat, LEAKY_SLOPE * yhat)  # (B*L, Cout)
            acts = [act_all[b * L:(b + 1) * L, :] for b in range(B)]

        # Flatten into (B, L*C) in position-major order (fc weights were permuted at
        # init to match PyTorch's channel-major .view flatten).
        C = acts[0].shape[-1]
        for b in range(B):
            for l in range(L):
                flat_scr[b:b + 1, l * C:(l + 1) * C] = acts[b][l:l + 1, :]

        # Final Linear, fed straight from VMEM: (B, L*C) x (L*C, O).
        o_ref[...] = (jnp.dot(flat_scr[...], fcw_ref[...],
                              preferred_element_type=jnp.float32) + fcb_ref[...])

    return kernel


# ---------------------------------------------------------------------------
# Wrapper
# ---------------------------------------------------------------------------
def cnn_forward(prepared, x):
    # x: (B, sequence_length, input_size)  -- same input as the PyTorch forward.
    B, L, _ = x.shape
    num_layers = len(prepared["layers"])
    hidden = prepared["layers"][-1]["gamma"].shape[-1]
    out_dim = prepared["fc_w"].shape[-1]

    inputs = [x]
    for lyr in prepared["layers"]:
        inputs += [lyr["w"], lyr["gamma"], lyr["beta"]]
    inputs += [prepared["fc_w"], prepared["fc_b"]]

    vmem = pl.BlockSpec(memory_space=pltpu.MemorySpace.VMEM)
    scratch = [pltpu.VMEM((B * L, lyr["w"].shape[0]), jnp.float32)   # im2col slabs
               for lyr in prepared["layers"]]
    scratch.append(pltpu.VMEM((B, L * hidden), jnp.float32))          # flatten buffer

    return pl.pallas_call(
        _make_fused_kernel(num_layers, B, L),
        out_shape=jax.ShapeDtypeStruct((B, out_dim), jnp.float32),
        in_specs=[vmem] * len(inputs),
        out_specs=vmem,
        scratch_shapes=scratch,
    )(*inputs)


# ---------------------------------------------------------------------------
# Parameters (PyTorch layout) + one-time kernel-layout preprocessing (hoisted)
# ---------------------------------------------------------------------------
def init_params(key, input_size, output_size, num_layers, hidden_size,
                sequence_length):
    params = {"layers": []}
    for l in range(num_layers):
        in_size = input_size if l == 0 else hidden_size
        key, k1, k2 = jax.random.split(key, 3)
        bound = 1.0 / (in_size * KSIZE) ** 0.5
        params["layers"].append({
            "w": jax.random.uniform(k1, (hidden_size, in_size, KSIZE),
                                    jnp.float32, -bound, bound),
            # Conv bias exists in the PyTorch module but has no effect on the output
            # because training-mode BatchNorm subtracts the per-channel mean.
            "b": jax.random.uniform(k2, (hidden_size,), jnp.float32, -bound, bound),
            "gamma": jnp.ones((hidden_size,), jnp.float32),
            "beta": jnp.zeros((hidden_size,), jnp.float32),
        })
    key, k1, k2 = jax.random.split(key, 3)
    fin = sequence_length * hidden_size
    bound = 1.0 / fin ** 0.5
    params["fc_w"] = jax.random.uniform(k1, (output_size, fin), jnp.float32,
                                        -bound, bound)
    params["fc_b"] = jax.random.uniform(k2, (output_size,), jnp.float32,
                                        -bound, bound)
    return params


def prepare_params(params, hidden_size, sequence_length):
    """One-time weight preprocessing (done once, never per forward call)."""
    prepped = {"layers": []}
    for lyr in params["layers"]:
        cout, cin, k = lyr["w"].shape
        # (Cout, Cin, K) -> (K*Cin, Cout) with row index k*Cin + c (im2col order).
        w_mat = jnp.transpose(lyr["w"], (2, 1, 0)).reshape(k * cin, cout)
        prepped["layers"].append({
            "w": w_mat,
            "gamma": lyr["gamma"].reshape(1, cout),
            "beta": lyr["beta"].reshape(1, cout),
        })
    out_dim, _ = params["fc_w"].shape
    # PyTorch flattens (B, hidden, seq) channel-major: column = c*seq + l.
    # The kernel flattens position-major:               row    = l*hidden + c.
    w3 = params["fc_w"].reshape(out_dim, hidden_size, sequence_length)
    prepped["fc_w"] = jnp.transpose(w3, (2, 1, 0)).reshape(
        sequence_length * hidden_size, out_dim)
    prepped["fc_b"] = params["fc_b"].reshape(1, out_dim)
    return prepped


# ---------------------------------------------------------------------------
if __name__ == "__main__":
    input_size = 4
    output_size = 8
    num_layers = 2
    hidden_size = 32
    sequence_length = 8
    batch = 2

    key = jax.random.PRNGKey(0)
    key, kx = jax.random.split(key)
    x = jax.random.normal(kx, (batch, sequence_length, input_size), jnp.float32)

    params = init_params(key, input_size, output_size, num_layers,
                         hidden_size, sequence_length)
    prepared = prepare_params(params, hidden_size, sequence_length)

    fwd = jax.jit(cnn_forward)
    out = fwd(prepared, x)
    jax.block_until_ready(out)
    assert out.shape == (batch, output_size)
    print("KERNEL_OK")
</pallas_src>

<mosaic_0001>
module attributes {stable_mosaic.version = 11 : i64} {
  func.func @kernel(%arg0: memref<2x8x4xf32, #tpu.memory_space<vmem>>, %arg1: memref<20x32xf32, #tpu.memory_space<vmem>>, %arg2: memref<1x32xf32, #tpu.memory_space<vmem>>, %arg3: memref<1x32xf32, #tpu.memory_space<vmem>>, %arg4: memref<160x32xf32, #tpu.memory_space<vmem>>, %arg5: memref<1x32xf32, #tpu.memory_space<vmem>>, %arg6: memref<1x32xf32, #tpu.memory_space<vmem>>, %arg7: memref<256x8xf32, #tpu.memory_space<vmem>>, %arg8: memref<1x8xf32, #tpu.memory_space<vmem>>, %arg9: memref<2x8xf32, #tpu.memory_space<vmem>>, %arg10: memref<16x20xf32, #tpu.memory_space<vmem>>, %arg11: memref<16x160xf32, #tpu.memory_space<vmem>>, %arg12: memref<2x256xf32, #tpu.memory_space<vmem>>) attributes {dimension_semantics = [], scalar_prefetch = 0 : i64, scratch_operands = 3 : i64, tpu.core_type = #tpu.core_type<tc>} {
    %c0 = arith.constant 0 : index
    %c0_0 = arith.constant 0 : index
    %c0_1 = arith.constant 0 : index
    %0 = vector.load %arg0[%c0, %c0_0, %c0_1] : memref<2x8x4xf32, #tpu.memory_space<vmem>>, vector<1x8x4xf32>
    %1 = vector.shape_cast %0 : vector<1x8x4xf32> to vector<8x4xf32>
    %c1 = arith.constant 1 : index
    %c0_2 = arith.constant 0 : index
    %c0_3 = arith.constant 0 : index
    %2 = vector.load %arg0[%c1, %c0_2, %c0_3] : memref<2x8x4xf32, #tpu.memory_space<vmem>>, vector<1x8x4xf32>
    %3 = vector.shape_cast %2 : vector<1x8x4xf32> to vector<8x4xf32>
    %cst = arith.constant 0.000000e+00 : f32
    %4 = vector.broadcast %cst : f32 to vector<2x4xf32>
    %5 = tpu.concatenate %4, %1, %4 in 0 : vector<2x4xf32>, vector<8x4xf32>, vector<2x4xf32> -> vector<12x4xf32>
    %6 = tpu.concatenate %4, %3, %4 in 0 : vector<2x4xf32>, vector<8x4xf32>, vector<2x4xf32> -> vector<12x4xf32>
    %7 = vector.extract_strided_slice %5 {offsets = [0, 0], sizes = [8, 4], strides = [1, 1]} : vector<12x4xf32> to vector<8x4xf32>
    %8 = vector.extract_strided_slice %6 {offsets = [0, 0], sizes = [8, 4], strides = [1, 1]} : vector<12x4xf32> to vector<8x4xf32>
    %9 = tpu.concatenate %7, %8 in 0 : vector<8x4xf32>, vector<8x4xf32> -> vector<16x4xf32>
    %c0_4 = arith.constant 0 : index
    %c0_5 = arith.constant 0 : index
    %10 = vector.load %arg10[%c0_4, %c0_5] : memref<16x20xf32, #tpu.memory_space<vmem>>, vector<16x4xf32>
    tpu.vector_store %arg10[%c0_4, %c0_5], %9 {strides = array<i32>} : memref<16x20xf32, #tpu.memory_space<vmem>>, vector<16x4xf32>,
    %11 = vector.extract_strided_slice %5 {offsets = [1, 0], sizes = [8, 4], strides = [1, 1]} : vector<12x4xf32> to vector<8x4xf32>
    %12 = vector.extract_strided_slice %6 {offsets = [1, 0], sizes = [8, 4], strides = [1, 1]} : vector<12x4xf32> to vector<8x4xf32>
    %13 = tpu.concatenate %11, %12 in 0 : vector<8x4xf32>, vector<8x4xf32> -> vector<16x4xf32>
    %c0_6 = arith.constant 0 : index
    %c4 = arith.constant 4 : index
    %14 = vector.load %arg10[%c0_6, %c4] : memref<16x20xf32, #tpu.memory_space<vmem>>, vector<16x4xf32>
    tpu.vector_store %arg10[%c0_6, %c4], %13 {strides = array<i32>} : memref<16x20xf32, #tpu.memory_space<vmem>>, vector<16x4xf32>,
    %15 = vector.extract_strided_slice %5 {offsets = [2, 0], sizes = [8, 4], strides = [1, 1]} : vector<12x4xf32> to vector<8x4xf32>
    %16 = vector.extract_strided_slice %6 {offsets = [2, 0], sizes = [8, 4], strides = [1, 1]} : vector<12x4xf32> to vector<8x4xf32>
    %17 = tpu.concatenate %15, %16 in 0 : vector<8x4xf32>, vector<8x4xf32> -> vector<16x4xf32>
    %c0_7 = arith.constant 0 : index
    %c8 = arith.constant 8 : index
    %18 = vector.load %arg10[%c0_7, %c8] : memref<16x20xf32, #tpu.memory_space<vmem>>, vector<16x4xf32>
    tpu.vector_store %arg10[%c0_7, %c8], %17 {strides = array<i32>} : memref<16x20xf32, #tpu.memory_space<vmem>>, vector<16x4xf32>,
    %19 = vector.extract_strided_slice %5 {offsets = [3, 0], sizes = [8, 4], strides = [1, 1]} : vector<12x4xf32> to vector<8x4xf32>
    %20 = vector.extract_strided_slice %6 {offsets = [3, 0], sizes = [8, 4], strides = [1, 1]} : vector<12x4xf32> to vector<8x4xf32>
    %21 = tpu.concatenate %19, %20 in 0 : vector<8x4xf32>, vector<8x4xf32> -> vector<16x4xf32>
    %c0_8 = arith.constant 0 : index
    %c12 = arith.constant 12 : index
    %22 = vector.load %arg10[%c0_8, %c12] : memref<16x20xf32, #tpu.memory_space<vmem>>, vector<16x4xf32>
    tpu.vector_store %arg10[%c0_8, %c12], %21 {strides = array<i32>} : memref<16x20xf32, #tpu.memory_space<vmem>>, vector<16x4xf32>,
    %23 = vector.extract_strided_slice %5 {offsets = [4, 0], sizes = [8, 4], strides = [1, 1]} : vector<12x4xf32> to vector<8x4xf32>
    %24 = vector.extract_strided_slice %6 {offsets = [4, 0], sizes = [8, 4], strides = [1, 1]} : vector<12x4xf32> to vector<8x4xf32>
    %25 = tpu.concatenate %23, %24 in 0 : vector<8x4xf32>, vector<8x4xf32> -> vector<16x4xf32>
    %c0_9 = arith.constant 0 : index
    %c16 = arith.constant 16 : index
    %26 = vector.load %arg10[%c0_9, %c16] : memref<16x20xf32, #tpu.memory_space<vmem>>, vector<16x4xf32>
    tpu.vector_store %arg10[%c0_9, %c16], %25 {strides = array<i32>} : memref<16x20xf32, #tpu.memory_space<vmem>>, vector<16x4xf32>,
    %c0_10 = arith.constant 0 : index
    %c0_11 = arith.constant 0 : index
    %27 = vector.load %arg10[%c0_10, %c0_11] : memref<16x20xf32, #tpu.memory_space<vmem>>, vector<16x20xf32>
    %c0_12 = arith.constant 0 : index
    %c0_13 = arith.constant 0 : index
    %28 = vector.load %arg1[%c0_12, %c0_13] : memref<20x32xf32, #tpu.memory_space<vmem>>, vector<20x32xf32>
    %cst_14 = arith.constant dense<0.000000e+00> : vector<16x32xf32>
    %29 = tpu.matmul %27, %28, %cst_14 {dimension_numbers = #tpu.dot_dimension_numbers<[1], [0], [0], [1], [0, 0, 1, 1], [], []>} : vector<16x20xf32>, vector<20x32xf32>, vector<16x32xf32> -> vector<16x32xf32>
    %cst_15 = arith.constant dense<0.000000e+00> : vector<32xf32>
    %30 = vector.multi_reduction <add>, %29, %cst_15 [0] : vector<16x32xf32> to vector<32xf32>
    %31 = vector.shape_cast %30 : vector<32xf32> to vector<1x32xf32>
    %cst_16 = arith.constant 1.600000e+01 : f32
    %32 = vector.broadcast %cst_16 : f32 to vector<1x32xf32>
    %33 = arith.divf %31, %32 : vector<1x32xf32>
    %34 = vector.broadcast %33 : vector<1x32xf32> to vector<16x32xf32>
    %35 = arith.subf %29, %34 : vector<16x32xf32>
    %36 = arith.mulf %35, %35 : vector<16x32xf32>
    %cst_17 = arith.constant dense<0.000000e+00> : vector<32xf32>
    %37 = vector.multi_reduction <add>, %36, %cst_17 [0] : vector<16x32xf32> to vector<32xf32>
    %38 = vector.shape_cast %37 : vector<32xf32> to vector<1x32xf32>
    %cst_18 = arith.constant 1.600000e+01 : f32
    %39 = vector.broadcast %cst_18 : f32 to vector<1x32xf32>
    %40 = arith.divf %38, %39 : vector<1x32xf32>
    %41 = vector.broadcast %33 : vector<1x32xf32> to vector<16x32xf32>
    %42 = arith.subf %29, %41 : vector<16x32xf32>
    %cst_19 = arith.constant 9.99999974E-6 : f32
    %43 = vector.broadcast %cst_19 : f32 to vector<1x32xf32>
    %44 = arith.addf %40, %43 : vector<1x32xf32>
    %45 = math.rsqrt %44 : vector<1x32xf32>
    %46 = vector.broadcast %45 : vector<1x32xf32> to vector<16x32xf32>
    %47 = arith.mulf %42, %46 : vector<16x32xf32>
    %c0_20 = arith.constant 0 : index
    %c0_21 = arith.constant 0 : index
    %48 = vector.load %arg2[%c0_20, %c0_21] : memref<1x32xf32, #tpu.memory_space<vmem>>, vector<1x32xf32>
    %49 = vector.broadcast %48 : vector<1x32xf32> to vector<16x32xf32>
    %50 = arith.mulf %47, %49 : vector<16x32xf32>
    %c0_22 = arith.constant 0 : index
    %c0_23 = arith.constant 0 : index
    %51 = vector.load %arg3[%c0_22, %c0_23] : memref<1x32xf32, #tpu.memory_space<vmem>>, vector<1x32xf32>
    %52 = vector.broadcast %51 : vector<1x32xf32> to vector<16x32xf32>
    %53 = arith.addf %50, %52 : vector<16x32xf32>
    %cst_24 = arith.constant 0.000000e+00 : f32
    %54 = vector.broadcast %cst_24 : f32 to vector<16x32xf32>
    %55 = arith.cmpf oge, %53, %54 : vector<16x32xf32>
    %cst_25 = arith.constant 0.00999999977 : f32
    %56 = vector.broadcast %cst_25 : f32 to vector<16x32xf32>
    %57 = arith.mulf %56, %53 : vector<16x32xf32>
    %58 = arith.select %55, %53, %57 : vector<16x32xi1>, vector<16x32xf32>
    %59 = vector.extract_strided_slice %58 {offsets = [0, 0], sizes = [8, 32], strides = [1, 1]} : vector<16x32xf32> to vector<8x32xf32>
    %60 = vector.extract_strided_slice %58 {offsets = [8, 0], sizes = [8, 32], strides = [1, 1]} : vector<16x32xf32> to vector<8x32xf32>
    %cst_26 = arith.constant 0.000000e+00 : f32
    %61 = vector.broadcast %cst_26 : f32 to vector<2x32xf32>
    %62 = tpu.concatenate %61, %59, %61 in 0 : vector<2x32xf32>, vector<8x32xf32>, vector<2x32xf32> -> vector<12x32xf32>
    %63 = tpu.concatenate %61, %60, %61 in 0 : vector<2x32xf32>, vector<8x32xf32>, vector<2x32xf32> -> vector<12x32xf32>
    %64 = vector.extract_strided_slice %62 {offsets = [0, 0], sizes = [8, 32], strides = [1, 1]} : vector<12x32xf32> to vector<8x32xf32>
    %65 = vector.extract_strided_slice %63 {offsets = [0, 0], sizes = [8, 32], strides = [1, 1]} : vector<12x32xf32> to vector<8x32xf32>
    %66 = tpu.concatenate %64, %65 in 0 : vector<8x32xf32>, vector<8x32xf32> -> vector<16x32xf32>
    %c0_27 = arith.constant 0 : index
    %c0_28 = arith.constant 0 : index
    %67 = vector.load %arg11[%c0_27, %c0_28] : memref<16x160xf32, #tpu.memory_space<vmem>>, vector<16x32xf32>
    tpu.vector_store %arg11[%c0_27, %c0_28], %66 {strides = array<i32>} : memref<16x160xf32, #tpu.memory_space<vmem>>, vector<16x32xf32>,
    %68 = vector.extract_strided_slice %62 {offsets = [1, 0], sizes = [8, 32], strides = [1, 1]} : vector<12x32xf32> to vector<8x32xf32>
    %69 = vector.extract_strided_slice %63 {offsets = [1, 0], sizes = [8, 32], strides = [1, 1]} : vector<12x32xf32> to vector<8x32xf32>
    %70 = tpu.concatenate %68, %69 in 0 : vector<8x32xf32>, vector<8x32xf32> -> vector<16x32xf32>
    %c0_29 = arith.constant 0 : index
    %c32 = arith.constant 32 : index
    %71 = vector.load %arg11[%c0_29, %c32] : memref<16x160xf32, #tpu.memory_space<vmem>>, vector<16x32xf32>
    tpu.vector_store %arg11[%c0_29, %c32], %70 {strides = array<i32>} : memref<16x160xf32, #tpu.memory_space<vmem>>, vector<16x32xf32>,
    %72 = vector.extract_strided_slice %62 {offsets = [2, 0], sizes = [8, 32], strides = [1, 1]} : vector<12x32xf32> to vector<8x32xf32>
    %73 = vector.extract_strided_slice %63 {offsets = [2, 0], sizes = [8, 32], strides = [1, 1]} : vector<12x32xf32> to vector<8x32xf32>
    %74 = tpu.concatenate %72, %73 in 0 : vector<8x32xf32>, vector<8x32xf32> -> vector<16x32xf32>
    %c0_30 = arith.constant 0 : index
    %c64 = arith.constant 64 : index
    %75 = vector.load %arg11[%c0_30, %c64] : memref<16x160xf32, #tpu.memory_space<vmem>>, vector<16x32xf32>
    tpu.vector_store %arg11[%c0_30, %c64], %74 {strides = array<i32>} : memref<16x160xf32, #tpu.memory_space<vmem>>, vector<16x32xf32>,
    %76 = vector.extract_strided_slice %62 {offsets = [3, 0], sizes = [8, 32], strides = [1, 1]} : vector<12x32xf32> to vector<8x32xf32>
    %77 = vector.extract_strided_slice %63 {offsets = [3, 0], sizes = [8, 32], strides = [1, 1]} : vector<12x32xf32> to vector<8x32xf32>
    %78 = tpu.concatenate %76, %77 in 0 : vector<8x32xf32>, vector<8x32xf32> -> vector<16x32xf32>
    %c0_31 = arith.constant 0 : index
    %c96 = arith.constant 96 : index
    %79 = vector.load %arg11[%c0_31, %c96] : memref<16x160xf32, #tpu.memory_space<vmem>>, vector<16x32xf32>
    tpu.vector_store %arg11[%c0_31, %c96], %78 {strides = array<i32>} : memref<16x160xf32, #tpu.memory_space<vmem>>, vector<16x32xf32>,
    %80 = vector.extract_strided_slice %62 {offsets = [4, 0], sizes = [8, 32], strides = [1, 1]} : vector<12x32xf32> to vector<8x32xf32>
    %81 = vector.extract_strided_slice %63 {offsets = [4, 0], sizes = [8, 32], strides = [1, 1]} : vector<12x32xf32> to vector<8x32xf32>
    %82 = tpu.concatenate %80, %81 in 0 : vector<8x32xf32>, vector<8x32xf32> -> vector<16x32xf32>
    %c0_32 = arith.constant 0 : index
    %c128 = arith.constant 128 : index
    %83 = vector.load %arg11[%c0_32, %c128] : memref<16x160xf32, #tpu.memory_space<vmem>>, vector<16x32xf32>
    tpu.vector_store %arg11[%c0_32, %c128], %82 {strides = array<i32>} : memref<16x160xf32, #tpu.memory_space<vmem>>, vector<16x32xf32>,
    %c0_33 = arith.constant 0 : index
    %c0_34 = arith.constant 0 : index
    %84 = vector.load %arg11[%c0_33, %c0_34] : memref<16x160xf32, #tpu.memory_space<vmem>>, vector<16x160xf32>
    %c0_35 = arith.constant 0 : index
    %c0_36 = arith.constant 0 : index
    %85 = vector.load %arg4[%c0_35, %c0_36] : memref<160x32xf32, #tpu.memory_space<vmem>>, vector<160x32xf32>
    %cst_37 = arith.constant dense<0.000000e+00> : vector<16x32xf32>
    %86 = tpu.matmul %84, %85, %cst_37 {dimension_numbers = #tpu.dot_dimension_numbers<[1], [0], [0], [1], [0, 0, 1, 1], [], []>} : vector<16x160xf32>, vector<160x32xf32>, vector<16x32xf32> -> vector<16x32xf32>
    %cst_38 = arith.constant dense<0.000000e+00> : vector<32xf32>
    %87 = vector.multi_reduction <add>, %86, %cst_38 [0] : vector<16x32xf32> to vector<32xf32>
    %88 = vector.shape_cast %87 : vector<32xf32> to vector<1x32xf32>
    %cst_39 = arith.constant 1.600000e+01 : f32
    %89 = vector.broadcast %cst_39 : f32 to vector<1x32xf32>
    %90 = arith.divf %88, %89 : vector<1x32xf32>
    %91 = vector.broadcast %90 : vector<1x32xf32> to vector<16x32xf32>
    %92 = arith.subf %86, %91 : vector<16x32xf32>
    %93 = arith.mulf %92, %92 : vector<16x32xf32>
    %cst_40 = arith.constant dense<0.000000e+00> : vector<32xf32>
    %94 = vector.multi_reduction <add>, %93, %cst_40 [0] : vector<16x32xf32> to vector<32xf32>
    %95 = vector.shape_cast %94 : vector<32xf32> to vector<1x32xf32>
    %cst_41 = arith.constant 1.600000e+01 : f32
    %96 = vector.broadcast %cst_41 : f32 to vector<1x32xf32>
    %97 = arith.divf %95, %96 : vector<1x32xf32>
    %98 = vector.broadcast %90 : vector<1x32xf32> to vector<16x32xf32>
    %99 = arith.subf %86, %98 : vector<16x32xf32>
    %cst_42 = arith.constant 9.99999974E-6 : f32
    %100 = vector.broadcast %cst_42 : f32 to vector<1x32xf32>
    %101 = arith.addf %97, %100 : vector<1x32xf32>
    %102 = math.rsqrt %101 : vector<1x32xf32>
    %103 = vector.broadcast %102 : vector<1x32xf32> to vector<16x32xf32>
    %104 = arith.mulf %99, %103 : vector<16x32xf32>
    %c0_43 = arith.constant 0 : index
    %c0_44 = arith.constant 0 : index
    %105 = vector.load %arg5[%c0_43, %c0_44] : memref<1x32xf32, #tpu.memory_space<vmem>>, vector<1x32xf32>
    %106 = vector.broadcast %105 : vector<1x32xf32> to vector<16x32xf32>
    %107 = arith.mulf %104, %106 : vector<16x32xf32>
    %c0_45 = arith.constant 0 : index
    %c0_46 = arith.constant 0 : index
    %108 = vector.load %arg6[%c0_45, %c0_46] : memref<1x32xf32, #tpu.memory_space<vmem>>, vector<1x32xf32>
    %109 = vector.broadcast %108 : vector<1x32xf32> to vector<16x32xf32>
    %110 = arith.addf %107, %109 : vector<16x32xf32>
    %cst_47 = arith.constant 0.000000e+00 : f32
    %111 = vector.broadcast %cst_47 : f32 to vector<16x32xf32>
    %112 = arith.cmpf oge, %110, %111 : vector<16x32xf32>
    %cst_48 = arith.constant 0.00999999977 : f32
    %113 = vector.broadcast %cst_48 : f32 to vector<16x32xf32>
    %114 = arith.mulf %113, %110 : vector<16x32xf32>
    %115 = arith.select %112, %110, %114 : vector<16x32xi1>, vector<16x32xf32>
    %116 = vector.extract_strided_slice %115 {offsets = [0, 0], sizes = [8, 32], strides = [1, 1]} : vector<16x32xf32> to vector<8x32xf32>
    %117 = vector.extract_strided_slice %115 {offsets = [8, 0], sizes = [8, 32], strides = [1, 1]} : vector<16x32xf32> to vector<8x32xf32>
    %118 = vector.extract_strided_slice %116 {offsets = [0, 0], sizes = [1, 32], strides = [1, 1]} : vector<8x32xf32> to vector<1x32xf32>
    %c0_49 = arith.constant 0 : index
    %c0_50 = arith.constant 0 : index
    %119 = vector.load %arg12[%c0_49, %c0_50] : memref<2x256xf32, #tpu.memory_space<vmem>>, vector<1x32xf32>
    tpu.vector_store %arg12[%c0_49, %c0_50], %118 {strides = array<i32>} : memref<2x256xf32, #tpu.memory_space<vmem>>, vector<1x32xf32>,
    %120 = vector.extract_strided_slice %116 {offsets = [1, 0], sizes = [1, 32], strides = [1, 1]} : vector<8x32xf32> to vector<1x32xf32>
    %c0_51 = arith.constant 0 : index
    %c32_52 = arith.constant 32 : index
    %121 = vector.load %arg12[%c0_51, %c32_52] : memref<2x256xf32, #tpu.memory_space<vmem>>, vector<1x32xf32>
    tpu.vector_store %arg12[%c0_51, %c32_52], %120 {strides = array<i32>} : memref<2x256xf32, #tpu.memory_space<vmem>>, vector<1x32xf32>,
    %122 = vector.extract_strided_slice %116 {offsets = [2, 0], sizes = [1, 32], strides = [1, 1]} : vector<8x32xf32> to vector<1x32xf32>
    %c0_53 = arith.constant 0 : index
    %c64_54 = arith.constant 64 : index
    %123 = vector.load %arg12[%c0_53, %c64_54] : memref<2x256xf32, #tpu.memory_space<vmem>>, vector<1x32xf32>
    tpu.vector_store %arg12[%c0_53, %c64_54], %122 {strides = array<i32>} : memref<2x256xf32, #tpu.memory_space<vmem>>, vector<1x32xf32>,
    %124 = vector.extract_strided_slice %116 {offsets = [3, 0], sizes = [1, 32], strides = [1, 1]} : vector<8x32xf32> to vector<1x32xf32>
    %c0_55 = arith.constant 0 : index
    %c96_56 = arith.constant 96 : index
    %125 = vector.load %arg12[%c0_55, %c96_56] : memref<2x256xf32, #tpu.memory_space<vmem>>, vector<1x32xf32>
    tpu.vector_store %arg12[%c0_55, %c96_56], %124 {strides = array<i32>} : memref<2x256xf32, #tpu.memory_space<vmem>>, vector<1x32xf32>,
    %126 = vector.extract_strided_slice %116 {offsets = [4, 0], sizes = [1, 32], strides = [1, 1]} : vector<8x32xf32> to vector<1x32xf32>
    %c0_57 = arith.constant 0 : index
    %c128_58 = arith.constant 128 : index
    %127 = vector.load %arg12[%c0_57, %c128_58] : memref<2x256xf32, #tpu.memory_space<vmem>>, vector<1x32xf32>
    tpu.vector_store %arg12[%c0_57, %c128_58], %126 {strides = array<i32>} : memref<2x256xf32, #tpu.memory_space<vmem>>, vector<1x32xf32>,
    %128 = vector.extract_strided_slice %116 {offsets = [5, 0], sizes = [1, 32], strides = [1, 1]} : vector<8x32xf32> to vector<1x32xf32>
    %c0_59 = arith.constant 0 : index
    %c160 = arith.constant 160 : index
    %129 = vector.load %arg12[%c0_59, %c160] : memref<2x256xf32, #tpu.memory_space<vmem>>, vector<1x32xf32>
    tpu.vector_store %arg12[%c0_59, %c160], %128 {strides = array<i32>} : memref<2x256xf32, #tpu.memory_space<vmem>>, vector<1x32xf32>,
    %130 = vector.extract_strided_slice %116 {offsets = [6, 0], sizes = [1, 32], strides = [1, 1]} : vector<8x32xf32> to vector<1x32xf32>
    %c0_60 = arith.constant 0 : index
    %c192 = arith.constant 192 : index
    %131 = vector.load %arg12[%c0_60, %c192] : memref<2x256xf32, #tpu.memory_space<vmem>>, vector<1x32xf32>
    tpu.vector_store %arg12[%c0_60, %c192], %130 {strides = array<i32>} : memref<2x256xf32, #tpu.memory_space<vmem>>, vector<1x32xf32>,
    %132 = vector.extract_strided_slice %116 {offsets = [7, 0], sizes = [1, 32], strides = [1, 1]} : vector<8x32xf32> to vector<1x32xf32>
    %c0_61 = arith.constant 0 : index
    %c224 = arith.constant 224 : index
    %133 = vector.load %arg12[%c0_61, %c224] : memref<2x256xf32, #tpu.memory_space<vmem>>, vector<1x32xf32>
    tpu.vector_store %arg12[%c0_61, %c224], %132 {strides = array<i32>} : memref<2x256xf32, #tpu.memory_space<vmem>>, vector<1x32xf32>,
    %134 = vector.extract_strided_slice %117 {offsets = [0, 0], sizes = [1, 32], strides = [1, 1]} : vector<8x32xf32> to vector<1x32xf32>
    %c1_62 = arith.constant 1 : index
    %c0_63 = arith.constant 0 : index
    %135 = vector.load %arg12[%c1_62, %c0_63] : memref<2x256xf32, #tpu.memory_space<vmem>>, vector<1x32xf32>
    tpu.vector_store %arg12[%c1_62, %c0_63], %134 {strides = array<i32>} : memref<2x256xf32, #tpu.memory_space<vmem>>, vector<1x32xf32>,
    %136 = vector.extract_strided_slice %117 {offsets = [1, 0], sizes = [1, 32], strides = [1, 1]} : vector<8x32xf32> to vector<1x32xf32>
    %c1_64 = arith.constant 1 : index
    %c32_65 = arith.constant 32 : index
    %137 = vector.load %arg12[%c1_64, %c32_65] : memref<2x256xf32, #tpu.memory_space<vmem>>, vector<1x32xf32>
    tpu.vector_store %arg12[%c1_64, %c32_65], %136 {strides = array<i32>} : memref<2x256xf32, #tpu.memory_space<vmem>>, vector<1x32xf32>,
    %138 = vector.extract_strided_slice %117 {offsets = [2, 0], sizes = [1, 32], strides = [1, 1]} : vector<8x32xf32> to vector<1x32xf32>
    %c1_66 = arith.constant 1 : index
    %c64_67 = arith.constant 64 : index
    %139 = vector.load %arg12[%c1_66, %c64_67] : memref<2x256xf32, #tpu.memory_space<vmem>>, vector<1x32xf32>
    tpu.vector_store %arg12[%c1_66, %c64_67], %138 {strides = array<i32>} : memref<2x256xf32, #tpu.memory_space<vmem>>, vector<1x32xf32>,
    %140 = vector.extract_strided_slice %117 {offsets = [3, 0], sizes = [1, 32], strides = [1, 1]} : vector<8x32xf32> to vector<1x32xf32>
    %c1_68 = arith.constant 1 : index
    %c96_69 = arith.constant 96 : index
    %141 = vector.load %arg12[%c1_68, %c96_69] : memref<2x256xf32, #tpu.memory_space<vmem>>, vector<1x32xf32>
    tpu.vector_store %arg12[%c1_68, %c96_69], %140 {strides = array<i32>} : memref<2x256xf32, #tpu.memory_space<vmem>>, vector<1x32xf32>,
    %142 = vector.extract_strided_slice %117 {offsets = [4, 0], sizes = [1, 32], strides = [1, 1]} : vector<8x32xf32> to vector<1x32xf32>
    %c1_70 = arith.constant 1 : index
    %c128_71 = arith.constant 128 : index
    %143 = vector.load %arg12[%c1_70, %c128_71] : memref<2x256xf32, #tpu.memory_space<vmem>>, vector<1x32xf32>
    tpu.vector_store %arg12[%c1_70, %c128_71], %142 {strides = array<i32>} : memref<2x256xf32, #tpu.memory_space<vmem>>, vector<1x32xf32>,
    %144 = vector.extract_strided_slice %117 {offsets = [5, 0], sizes = [1, 32], strides = [1, 1]} : vector<8x32xf32> to vector<1x32xf32>
    %c1_72 = arith.constant 1 : index
    %c160_73 = arith.constant 160 : index
    %145 = vector.load %arg12[%c1_72, %c160_73] : memref<2x256xf32, #tpu.memory_space<vmem>>, vector<1x32xf32>
    tpu.vector_store %arg12[%c1_72, %c160_73], %144 {strides = array<i32>} : memref<2x256xf32, #tpu.memory_space<vmem>>, vector<1x32xf32>,
    %146 = vector.extract_strided_slice %117 {offsets = [6, 0], sizes = [1, 32], strides = [1, 1]} : vector<8x32xf32> to vector<1x32xf32>
    %c1_74 = arith.constant 1 : index
    %c192_75 = arith.constant 192 : index
    %147 = vector.load %arg12[%c1_74, %c192_75] : memref<2x256xf32, #tpu.memory_space<vmem>>, vector<1x32xf32>
    tpu.vector_store %arg12[%c1_74, %c192_75], %146 {strides = array<i32>} : memref<2x256xf32, #tpu.memory_space<vmem>>, vector<1x32xf32>,
    %148 = vector.extract_strided_slice %117 {offsets = [7, 0], sizes = [1, 32], strides = [1, 1]} : vector<8x32xf32> to vector<1x32xf32>
    %c1_76 = arith.constant 1 : index
    %c224_77 = arith.constant 224 : index
    %149 = vector.load %arg12[%c1_76, %c224_77] : memref<2x256xf32, #tpu.memory_space<vmem>>, vector<1x32xf32>
    tpu.vector_store %arg12[%c1_76, %c224_77], %148 {strides = array<i32>} : memref<2x256xf32, #tpu.memory_space<vmem>>, vector<1x32xf32>,
    %c0_78 = arith.constant 0 : index
    %c0_79 = arith.constant 0 : index
    %150 = vector.load %arg12[%c0_78, %c0_79] : memref<2x256xf32, #tpu.memory_space<vmem>>, vector<2x256xf32>
    %c0_80 = arith.constant 0 : index
    %c0_81 = arith.constant 0 : index
    %151 = vector.load %arg7[%c0_80, %c0_81] : memref<256x8xf32, #tpu.memory_space<vmem>>, vector<256x8xf32>
    %cst_82 = arith.constant dense<0.000000e+00> : vector<2x8xf32>
    %152 = tpu.matmul %150, %151, %cst_82 {dimension_numbers = #tpu.dot_dimension_numbers<[1], [0], [0], [1], [0, 0, 1, 1], [], []>} : vector<2x256xf32>, vector<256x8xf32>, vector<2x8xf32> -> vector<2x8xf32>
    %c0_83 = arith.constant 0 : index
    %c0_84 = arith.constant 0 : index
    %153 = vector.load %arg8[%c0_83, %c0_84] : memref<1x8xf32, #tpu.memory_space<vmem>>, vector<1x8xf32>
    %154 = vector.broadcast %153 : vector<1x8xf32> to vector<2x8xf32>
    %155 = arith.addf %152, %154 : vector<2x8xf32>
    %c0_85 = arith.constant 0 : index
    %c0_86 = arith.constant 0 : index
    %156 = vector.load %arg9[%c0_85, %c0_86] : memref<2x8xf32, #tpu.memory_space<vmem>>, vector<2x8xf32>
    tpu.vector_store %arg9[%c0_85, %c0_86], %155 {strides = array<i32>} : memref<2x8xf32, #tpu.memory_space<vmem>>, vector<2x8xf32>,
    return
  }
}

</mosaic_0001>

<llo_original>
// kernel: cnn_forward.1
$region0: #{cnn_forward.1}
  #allocation0 [shape = 'u32[]', space=smem, size = 0x4, offset = 0x4, fixed_abs, tag = 'smem constant byte address 0x4 - core index']
  #allocation1 [shape = 'u32[144,128]{1,0:T(1,128)}', space=vmem, size = 0x12000, scoped, tag = 'internal scratch']
  #allocation2 [shape = 'f32[16,20]{1,0:T(8,128)}', space=vmem, size = 0x2000, scoped, tag = 'scratch operand']
  #allocation3 [shape = 'f32[16,160]{1,0:T(8,128)}', space=vmem, size = 0x4000, scoped, tag = 'scratch operand']
  #allocation4 [shape = 'f32[2,256]{1,0:T(2,128)}', space=vmem, size = 0x800, scoped, tag = 'scratch operand']
  %s0 = inlined_call_operand.vmem [shape: f32[2,8,4], index: 0, kind: input, shape index: {}]
  %s1 = inlined_call_operand.vmem [shape: f32[20,32], index: 1, kind: input, shape index: {}]
  %s2 = inlined_call_operand.vmem [shape: f32[1,32], index: 2, kind: input, shape index: {}]
  %s3 = inlined_call_operand.vmem [shape: f32[1,32], index: 3, kind: input, shape index: {}]
  %s4 = inlined_call_operand.vmem [shape: f32[160,32], index: 4, kind: input, shape index: {}]
  %s5 = inlined_call_operand.vmem [shape: f32[1,32], index: 5, kind: input, shape index: {}]
  %s6 = inlined_call_operand.vmem [shape: f32[1,32], index: 6, kind: input, shape index: {}]
  %s7 = inlined_call_operand.vmem [shape: f32[256,8], index: 7, kind: input, shape index: {}]
  %s8 = inlined_call_operand.vmem [shape: f32[1,8], index: 8, kind: input, shape index: {}]
  %s9 = inlined_call_operand.hbm [shape: f32[2,8], index: 9, kind: output, shape index: {}]
  %s10 = sld [smem:[#allocation0]]
  $region46: #{cnn_forward.1} parent=0
    _
  %s12 = ssub.s32 1, %s10
  %s13 = scalar_select 0, %s12, %s10
  $region1: #{cnn_forward.1} parent=0
    #allocation5 [shape = 'u8[1024]{0}', space=vmem, size = 0x400, scoped, tag = 'output window, operand 0, single buffered']
    #allocation6 [shape = 's32[1]{0}', space=sflag, size = 0x4, scoped, tag = 'scoped memory for cnn_forward.1']
    %14 = vsyncpa [#allocation6], 0
    // Predicated region
    $region2: #{cnn_forward.1} parent=1 // pred_check
      _
    $region3: #{cnn_forward.1} parent=1 // pred_check_branch
      %16 = sbr.rel (0) target = $region5
    $region4: #{cnn_forward.1} parent=1 // pred_region
      _
    $region5: #{cnn_forward.1} parent=1 // pred_fallthru
      _
    // Predicated region
    $region6: #{cnn_forward.1} parent=1 // pred_check
      _
    $region7: #{cnn_forward.1} parent=1 // pred_check_branch
      %18 = sbr.rel (0) target = $region9
    $region8: #{cnn_forward.1} parent=1 // pred_region
      _
    $region9: #{cnn_forward.1} parent=1 // pred_fallthru
      _
    // Predicated region
    $region10: #{cnn_forward.1} parent=1 // pred_check
      _
    $region11: #{cnn_forward.1} parent=1 // pred_check_branch
      %20 = sbr.rel (0) target = $region13
    $region12: #{cnn_forward.1} parent=1 // pred_region
      _
    $region13: #{cnn_forward.1} parent=1 // pred_fallthru
      _
    // Predicated region
    $region14: #{cnn_forward.1} parent=1 // pred_check
      _
    $region15: #{cnn_forward.1} parent=1 // pred_check_branch
      %22 = sbr.rel (0) target = $region17
    $region16: #{cnn_forward.1} parent=1 // pred_region
      _
    $region17: #{cnn_forward.1} parent=1 // pred_fallthru
      _
    // Predicated region
    $region18: #{cnn_forward.1} parent=1 // pred_check
      _
    $region19: #{cnn_forward.1} parent=1 // pred_check_branch
      %24 = sbr.rel (0) target = $region21
    $region20: #{cnn_forward.1} parent=1 // pred_region
      _
    $region21: #{cnn_forward.1} parent=1 // pred_fallthru
      _
    // Predicated region
    $region22: #{cnn_forward.1} parent=1 // pred_check
      _
    $region23: #{cnn_forward.1} parent=1 // pred_check_branch
      %26 = sbr.rel (0) target = $region25
    $region24: #{cnn_forward.1} parent=1 // pred_region
      _
    $region25: #{cnn_forward.1} parent=1 // pred_fallthru
      _
    // Predicated region
    $region26: #{cnn_forward.1} parent=1 // pred_check
      _
    $region27: #{cnn_forward.1} parent=1 // pred_check_branch
      %28 = sbr.rel (0) target = $region29
    $region28: #{cnn_forward.1} parent=1 // pred_region
      _
    $region29: #{cnn_forward.1} parent=1 // pred_fallthru
      _
    // Predicated region
    $region30: #{cnn_forward.1} parent=1 // pred_check
      _
    $region31: #{cnn_forward.1} parent=1 // pred_check_branch
      %30 = sbr.rel (0) target = $region33
    $region32: #{cnn_forward.1} parent=1 // pred_region
      _
    $region33: #{cnn_forward.1} parent=1 // pred_fallthru
      _
    // Predicated region
    $region34: #{cnn_forward.1} parent=1 // pred_check
      _
    $region35: #{cnn_forward.1} parent=1 // pred_check_branch
      %32 = sbr.rel (0) target = $region37
    $region36: #{cnn_forward.1} parent=1 // pred_region
      _
    $region37: #{cnn_forward.1} parent=1 // pred_fallthru
      _
    %v33 = vld [vmem:[%s0] sm:$0xff]
    %s34 = scalar_lea.vmem %s0, 8
    %v35 = vld [vmem:[%s34] sm:$0xff]
    %v37 = vrot.slane %v33, 6
    %vm39 = vcmask 1041408
    %v40 = vsel %vm39, 0.0, %v37
    %v41 = vsel %vm39, %v37, 0.0
    %v43 = vrot.slane %v35, 6
    %v45 = vsel %vm39, 0.0, %v43
    %v46 = vsel %vm39, %v43, 0.0
    %vm47 = vcmask 31744
    %48 = vst.msk [vmem:[#allocation2] sm:$0xff] %vm47, %v40
    %49 = vst.msk [vmem:[#allocation2 + $0x8] sm:$0xff] %vm47, %v45
    %vm52 = vcmask 1046528
    %v53 = vrot.slane %v40, 1
    %v54 = vrot.slane %v41, 1
    %v55 = vsel %vm52, %v53, %v54
    %v58 = vrot.slane %v45, 1
    %v59 = vrot.slane %v46, 1
    %v60 = vsel %vm52, %v58, %v59
    %61 = vrot.lane.b32.xlu0 %v55, 4
    %v62 = vpop.permute.xlu0 %61
    %63 = vrot.lane.b32.xlu0 %v60, 4
    %v64 = vpop.permute.xlu0 %63
    %vm67 = vcmask 64544
    %68 = vst.msk [vmem:[#allocation2] sm:$0xff] %vm67, %v62
    %69 = vst.msk [vmem:[#allocation2 + $0x8] sm:$0xff] %vm67, %v64
    %vm70 = vcmask 1045504
    %v71 = vrot.slane %v40, 2
    %v72 = vrot.slane %v41, 2
    %v73 = vsel %vm70, %v71, %v72
    %v74 = vrot.slane %v45, 2
    %v75 = vrot.slane %v46, 2
    %v76 = vsel %vm70, %v74, %v75
    %77 = vrot.lane.b32.xlu0 %v73, 8
    %v78 = vpop.permute.xlu0 %77
    %79 = vrot.lane.b32.xlu0 %v76, 8
    %v80 = vpop.permute.xlu0 %79
    %vm83 = vcmask 97344
    %84 = vst.msk [vmem:[#allocation2] sm:$0xff] %vm83, %v78
    %85 = vst.msk [vmem:[#allocation2 + $0x8] sm:$0xff] %vm83, %v80
    %vm86 = vcmask 1044480
    %v87 = vrot.slane %v40, 3
    %v88 = vrot.slane %v41, 3
    %v89 = vsel %vm86, %v87, %v88
    %v90 = vrot.slane %v45, 3
    %v91 = vrot.slane %v46, 3
    %v92 = vsel %vm86, %v90, %v91
    %93 = vrot.lane.b32.xlu0 %v89, 12
    %v94 = vpop.permute.xlu0 %93
    %95 = vrot.lane.b32.xlu0 %v92, 12
    %v96 = vpop.permute.xlu0 %95
    %vm99 = vcmask 130144
    %100 = vst.msk [vmem:[#allocation2] sm:$0xff] %vm99, %v94
    %101 = vst.msk [vmem:[#allocation2 + $0x8] sm:$0xff] %vm99, %v96
    %vm102 = vcmask 1043456
    %v103 = vrot.slane %v40, 4
    %v104 = vrot.slane %v41, 4
    %v105 = vsel %vm102, %v103, %v104
    %v106 = vrot.slane %v45, 4
    %v107 = vrot.slane %v46, 4
    %v108 = vsel %vm102, %v106, %v107
    %109 = vrot.lane.b32.xlu0 %v105, 16
    %v110 = vpop.permute.xlu0 %109
    %111 = vrot.lane.b32.xlu0 %v108, 16
    %v112 = vpop.permute.xlu0 %111
    %vm115 = vcmask 162944
    %116 = vst.msk [vmem:[#allocation2] sm:$0xff] %vm115, %v110
    %117 = vst.msk [vmem:[#allocation2 + $0x8] sm:$0xff] %vm115, %v112
    %v118 = vld [vmem:[#allocation2] sm:$0xff]
    %v119 = vld [vmem:[#allocation2 + $0x8] sm:$0xff]
    %v120 = vld [vmem:[%s1] sm:$0xff]
    %v121 = vld [vmem:[%s1 + $0x8] sm:$0xff]
    %v122 = vld [vmem:[%s1 + $0x10] sm:$0xf]
    %vm123 = vcmask 162816
    %v125 = vsel %vm123, %v118, 0
    %v128 = vsel %vm123, %v119, 0
    %v131 = vsel %vm102, %v122, 0
    %133 = vmatprep.subr.mxu0 0.0
    %134 = vmatpush1.msra.mxu0 0.0
    %135 = vmatprep.subr.mxu0 0.0
    %136 = vmatpush1.msra.mxu0 0.0
    %137 = vmatprep.subr.mxu0 0.0
    %138 = vmatpush1.msra.mxu0 0.0
    %139 = vmatprep.subr.mxu0 0.0
    %140 = vmatpush1.msra.mxu0 0.0
    %141 = vmatprep.subr.mxu0 0.0
    %142 = vmatpush1.msra.mxu0 0.0
    %143 = vmatprep.subr.mxu0 0.0
    %144 = vmatpush1.msra.mxu0 0.0
    %145 = vmatprep.subr.mxu0 0.0
    %146 = vmatpush1.msra.mxu0 0.0
    %147 = vmatprep.subr.mxu0 0.0
    %148 = vmatpush1.msra.mxu0 0.0
    %149 = vmatprep.subr.mxu0 0.0
    %150 = vmatpush1.msra.mxu0 0.0
    %151 = vmatprep.subr.mxu0 0.0
    %152 = vmatpush1.msra.mxu0 0.0
    %153 = vmatprep.subr.mxu0 0.0
    %154 = vmatpush1.msra.mxu0 0.0
    %155 = vmatprep.subr.mxu0 0.0
    %156 = vmatpush1.msra.mxu0 0.0
    %157 = vmatprep.subr.mxu0 0.0
    %158 = vmatpush1.msra.mxu0 0.0
    %159 = vmatprep.subr.mxu0 0.0
    %160 = vmatpush1.msra.mxu0 %v131
    %161 = vmatprep.subr.mxu0 0.0
    %162 = vmatpush1.msra.mxu0 %v121
    %163 = vmatprep.subr.mxu0 0.0
    %164 = vmatpush1.msra.mxu0 %v120
    %165 = vmatprep.subr.mxu0 0.0
    %166 = vmatpush2.msra.mxu0 0.0
    %167 = vmatprep.subr.mxu0 0.0
    %168 = vmatpush2.msra.mxu0 0.0
    %169 = vmatprep.subr.mxu0 0.0
    %170 = vmatpush2.msra.mxu0 0.0
    %171 = vmatprep.subr.mxu0 0.0
    %172 = vmatpush2.msra.mxu0 0.0
    %173 = vmatprep.subr.mxu0 0.0
    %174 = vmatpush2.msra.mxu0 0.0
    %175 = vmatprep.subr.mxu0 0.0
    %176 = vmatpush2.msra.mxu0 0.0
    %177 = vmatprep.subr.mxu0 0.0
    %178 = vmatpush2.msra.mxu0 0.0
    %179 = vmatprep.subr.mxu0 0.0
    %180 = vmatpush2.msra.mxu0 0.0
    %181 = vmatprep.subr.mxu0 0.0
    %182 = vmatpush2.msra.mxu0 0.0
    %183 = vmatprep.subr.mxu0 0.0
    %184 = vmatpush2.msra.mxu0 0.0
    %185 = vmatprep.subr.mxu0 0.0
    %186 = vmatpush2.msra.mxu0 0.0
    %187 = vmatprep.subr.mxu0 0.0
    %188 = vmatpush2.msra.mxu0 0.0
    %189 = vmatprep.subr.mxu0 0.0
    %190 = vmatpush2.msra.mxu0 0.0
    %191 = vmatprep.subr.mxu0 0.0
    %192 = vmatpush2.msra.mxu0 0.0
    %193 = vmatprep.subr.mxu0 0.0
    %194 = vmatpush2.msra.mxu0 0.0
    %195 = vmatprep.subr.mxu0 0.0
    %196 = vmatpush2.msra.mxu0 0.0
    %197 = vmatprep.mubr.f32.mxu0 0.0
    %198 = vmatmul.mubr.f32.gmra.mxu0 %v125
    %v199 = vpop.f32.mrf.mxu0
    %v200 = vadd.f32 0.0, %v199
    %v201 = vpop.f32.mrf.mxu0
    %202 = vmatprep.mubr.f32.mxu0 0.0
    %203 = vmatmul.mubr.f32.gmra.mxu0 %v128
    %v204 = vpop.f32.mrf.mxu0
    %v205 = vadd.f32 0.0, %v204
    %v206 = vpop.f32.mrf.mxu0
    %207 = vdwg.mxu0
    %vm208 = vcmask 261120
    %v209 = vsel %vm208, %v200, 0.0
    %v210 = vsel %vm208, %v205, 0.0
    %v211 = vadd.f32 %v209, %v210
    %v212 = vrot.slane %v211, 4
    %v213 = vadd.f32 %v211, %v212
    %v214 = vrot.slane %v213, 2
    %v215 = vadd.f32 %v213, %v214
    %v216 = vrot.slane %v215, 1
    %v217 = vadd.f32 %v215, %v216
    %v218 = vrcp.pop 16.0
    %v219 = vmul.f32 %v217, %v218
    %v220 = vsub.f32 %v200, %v219
    %v221 = vsub.f32 %v205, %v219
    %v222 = vmul.f32 %v220, %v220
    %v223 = vmul.f32 %v221, %v221
    %v224 = vsel %vm208, %v222, 0.0
    %v225 = vsel %vm208, %v223, 0.0
    %v226 = vadd.f32 %v224, %v225
    %v227 = vrot.slane %v226, 4
    %v228 = vadd.f32 %v226, %v227
    %v229 = vrot.slane %v228, 2
    %v230 = vadd.f32 %v228, %v229
    %v231 = vrot.slane %v230, 1
    %v232 = vadd.f32 %v230, %v231
    %v233 = vmul.f32 %v232, %v218
    %v234 = vadd.f32 %v233, 1e-05
    %v235 = vrsqrt.pop %v234
    %v236 = vmul.f32 %v220, %v235
    %v237 = vmul.f32 %v221, %v235
    %v238 = vld [vmem:[%s2] sm:$0x1]
    %v240 = vlaneseq
    %v241 = vshrl.u32 %v240, 7
    %v242 = vsub.s32 0, %v241
    %v243 = vrot.slane %v238, %v242
    %v245 = vmul.f32 %v236, %v243
    %v246 = vmul.f32 %v237, %v243
    %v247 = vld [vmem:[%s3] sm:$0x1]
    %v249 = vlaneseq
    %v250 = vshrl.u32 %v249, 7
    %v251 = vsub.s32 0, %v250
    %v252 = vrot.slane %v247, %v251
    %v254 = vadd.f32 %v245, %v252
    %v255 = vadd.f32 %v246, %v252
    %vm256 = vcmp.ge.f32.partialorder %v254, 0.0
    %vm257 = vcmp.ge.f32.partialorder %v255, 0.0
    %v258 = vmul.f32 %v254, 0.01
    %v259 = vmul.f32 %v255, 0.01
    %v260 = vsel %vm256, %v254, %v258
    %v261 = vsel %vm257, %v255, %v259
    %v263 = vrot.slane %v260, 6
    %v265 = vsel %vm39, 0.0, %v263
    %v266 = vsel %vm39, %v263, 0.0
    %v268 = vrot.slane %v261, 6
    %v270 = vsel %vm39, 0.0, %v268
    %v271 = vsel %vm39, %v268, 0.0
    %272 = vst.msk [vmem:[#allocation3] sm:$0xff] %vm208, %v265
    %273 = vst.msk [vmem:[#allocation3 + $0x10] sm:$0xff] %vm208, %v270
    %v276 = vrot.slane %v265, 1
    %v277 = vrot.slane %v266, 1
    %v278 = vsel %vm52, %v276, %v277
    %v281 = vrot.slane %v270, 1
    %v282 = vrot.slane %v271, 1
    %v283 = vsel %vm52, %v281, %v282
    %284 = vrot.lane.b32.xlu0 %v278, 32
    %v285 = vpop.permute.xlu0 %284
    %286 = vrot.lane.b32.xlu0 %v283, 32
    %v287 = vpop.permute.xlu0 %286
    %vm290 = vcmask 523520
    %291 = vst.msk [vmem:[#allocation3] sm:$0xff] %vm290, %v285
    %292 = vst.msk [vmem:[#allocation3 + $0x10] sm:$0xff] %vm290, %v287
    %v293 = vrot.slane %v265, 2
    %v294 = vrot.slane %v266, 2
    %v295 = vsel %vm70, %v293, %v294
    %v296 = vrot.slane %v270, 2
    %v297 = vrot.slane %v271, 2
    %v298 = vsel %vm70, %v296, %v297
    %299 = vrot.lane.b32.xlu0 %v295, 64
    %v300 = vpop.permute.xlu0 %299
    %301 = vrot.lane.b32.xlu0 %v298, 64
    %v302 = vpop.permute.xlu0 %301
    %vm305 = vcmask 785920
    %306 = vst.msk [vmem:[#allocation3] sm:$0xff] %vm305, %v300
    %307 = vst.msk [vmem:[#allocation3 + $0x10] sm:$0xff] %vm305, %v302
    %v308 = vrot.slane %v265, 3
    %v309 = vrot.slane %v266, 3
    %v310 = vsel %vm86, %v308, %v309
    %v311 = vrot.slane %v270, 3
    %v312 = vrot.slane %v271, 3
    %v313 = vsel %vm86, %v311, %v312
    %314 = vrot.lane.b32.xlu0 %v310, 96
    %v315 = vpop.permute.xlu0 %314
    %316 = vrot.lane.b32.xlu0 %v313, 96
    %v317 = vpop.permute.xlu0 %316
    %vm320 = vcmask 1048320
    %321 = vst.msk [vmem:[#allocation3] sm:$0xff] %vm320, %v315
    %322 = vst.msk [vmem:[#allocation3 + $0x10] sm:$0xff] %vm320, %v317
    %v323 = vrot.slane %v265, 4
    %v324 = vrot.slane %v266, 4
    %v325 = vsel %vm102, %v323, %v324
    %v327 = vrot.slane %v270, 4
    %v328 = vrot.slane %v271, 4
    %v329 = vsel %vm102, %v327, %v328
    %331 = vst.msk [vmem:[#allocation3 + $0x8] sm:$0xff] %vm208, %v325
    %332 = vst.msk [vmem:[#allocation3 + $0x18] sm:$0xff] %vm208, %v329
    %v333 = vld [vmem:[#allocation3] sm:$0xff]
    %v334 = vld [vmem:[#allocation3 + $0x8] sm:$0xff]
    %v335 = vld [vmem:[#allocation3 + $0x10] sm:$0xff]
    %v336 = vld [vmem:[#allocation3 + $0x18] sm:$0xff]
    %v337 = vld [vmem:[%s4] sm:$0xff]
    %v338 = vld [vmem:[%s4 + $0x8] sm:$0xff]
    %v339 = vld [vmem:[%s4 + $0x10] sm:$0xff]
    %v340 = vld [vmem:[%s4 + $0x18] sm:$0xff]
    %v341 = vld [vmem:[%s4 + $0x20] sm:$0xff]
    %v342 = vld [vmem:[%s4 + $0x28] sm:$0xff]
    %v343 = vld [vmem:[%s4 + $0x30] sm:$0xff]
    %v344 = vld [vmem:[%s4 + $0x38] sm:$0xff]
    %v345 = vld [vmem:[%s4 + $0x40] sm:$0xff]
    %v346 = vld [vmem:[%s4 + $0x48] sm:$0xff]
    %v347 = vld [vmem:[%s4 + $0x50] sm:$0xff]
    %v348 = vld [vmem:[%s4 + $0x58] sm:$0xff]
    %v349 = vld [vmem:[%s4 + $0x60] sm:$0xff]
    %v350 = vld [vmem:[%s4 + $0x68] sm:$0xff]
    %v351 = vld [vmem:[%s4 + $0x70] sm:$0xff]
    %v352 = vld [vmem:[%s4 + $0x78] sm:$0xff]
    %v353 = vld [vmem:[%s4 + $0x80] sm:$0xff]
    %v354 = vld [vmem:[%s4 + $0x88] sm:$0xff]
    %v355 = vld [vmem:[%s4 + $0x90] sm:$0xff]
    %v356 = vld [vmem:[%s4 + $0x98] sm:$0xff]
    %v358 = vsel %vm208, %v334, 0
    %v361 = vsel %vm208, %v336, 0
    %363 = vmatprep.subr.mxu0 0.0
    %364 = vmatpush1.msra.mxu0 %v352
    %365 = vmatprep.subr.mxu0 0.0
    %366 = vmatpush1.msra.mxu0 %v351
    %367 = vmatprep.subr.mxu0 0.0
    %368 = vmatpush1.msra.mxu0 %v350
    %369 = vmatprep.subr.mxu0 0.0
    %370 = vmatpush1.msra.mxu0 %v349
    %371 = vmatprep.subr.mxu0 0.0
    %372 = vmatpush1.msra.mxu0 %v348
    %373 = vmatprep.subr.mxu0 0.0
    %374 = vmatpush1.msra.mxu0 %v347
    %375 = vmatprep.subr.mxu0 0.0
    %376 = vmatpush1.msra.mxu0 %v346
    %377 = vmatprep.subr.mxu0 0.0
    %378 = vmatpush1.msra.mxu0 %v345
    %379 = vmatprep.subr.mxu0 0.0
    %380 = vmatpush1.msra.mxu0 %v344
    %381 = vmatprep.subr.mxu0 0.0
    %382 = vmatpush1.msra.mxu0 %v343
    %383 = vmatprep.subr.mxu0 0.0
    %384 = vmatpush1.msra.mxu0 %v342
    %385 = vmatprep.subr.mxu0 0.0
    %386 = vmatpush1.msra.mxu0 %v341
    %387 = vmatprep.subr.mxu0 0.0
    %388 = vmatpush1.msra.mxu0 %v340
    %389 = vmatprep.subr.mxu0 0.0
    %390 = vmatpush1.msra.mxu0 %v339
    %391 = vmatprep.subr.mxu0 0.0
    %392 = vmatpush1.msra.mxu0 %v338
    %393 = vmatprep.subr.mxu0 0.0
    %394 = vmatpush1.msra.mxu0 %v337
    %395 = vmatprep.subr.mxu0 0.0
    %396 = vmatpush2.msra.mxu0 0.0
    %397 = vmatprep.subr.mxu0 0.0
    %398 = vmatpush2.msra.mxu0 0.0
    %399 = vmatprep.subr.mxu0 0.0
    %400 = vmatpush2.msra.mxu0 0.0
    %401 = vmatprep.subr.mxu0 0.0
    %402 = vmatpush2.msra.mxu0 0.0
    %403 = vmatprep.subr.mxu0 0.0
    %404 = vmatpush2.msra.mxu0 0.0
    %405 = vmatprep.subr.mxu0 0.0
    %406 = vmatpush2.msra.mxu0 0.0
    %407 = vmatprep.subr.mxu0 0.0
    %408 = vmatpush2.msra.mxu0 0.0
    %409 = vmatprep.subr.mxu0 0.0
    %410 = vmatpush2.msra.mxu0 0.0
    %411 = vmatprep.subr.mxu0 0.0
    %412 = vmatpush2.msra.mxu0 0.0
    %413 = vmatprep.subr.mxu0 0.0
    %414 = vmatpush2.msra.mxu0 0.0
    %415 = vmatprep.subr.mxu0 0.0
    %416 = vmatpush2.msra.mxu0 0.0
    %417 = vmatprep.subr.mxu0 0.0
    %418 = vmatpush2.msra.mxu0 0.0
    %419 = vmatprep.subr.mxu0 0.0
    %420 = vmatpush2.msra.mxu0 %v356
    %421 = vmatprep.subr.mxu0 0.0
    %422 = vmatpush2.msra.mxu0 %v355
    %423 = vmatprep.subr.mxu0 0.0
    %424 = vmatpush2.msra.mxu0 %v354
    %425 = vmatprep.subr.mxu0 0.0
    %426 = vmatpush2.msra.mxu0 %v353
    %427 = vmatprep.mubr.f32.mxu0 %v358
    %428 = vmatmul.mubr.f32.gmra.mxu0 %v333
    %v429 = vpop.f32.mrf.mxu0
    %v430 = vadd.f32 0.0, %v429
    %v431 = vpop.f32.mrf.mxu0
    %432 = vmatprep.mubr.f32.mxu0 %v361
    %433 = vmatmul.mubr.f32.gmra.mxu0 %v335
    %v434 = vpop.f32.mrf.mxu0
    %v435 = vadd.f32 0.0, %v434
    %v436 = vpop.f32.mrf.mxu0
    %437 = vdwg.mxu0
    %v438 = vsel %vm208, %v430, 0.0
    %v439 = vsel %vm208, %v435, 0.0
    %v440 = vadd.f32 %v438, %v439
    %v441 = vrot.slane %v440, 4
    %v442 = vadd.f32 %v440, %v441
    %v443 = vrot.slane %v442, 2
    %v444 = vadd.f32 %v442, %v443
    %v445 = vrot.slane %v444, 1
    %v446 = vadd.f32 %v444, %v445
    %v447 = vmul.f32 %v446, %v218
    %v448 = vsub.f32 %v430, %v447
    %v449 = vsub.f32 %v435, %v447
    %v450 = vmul.f32 %v448, %v448
    %v451 = vmul.f32 %v449, %v449
    %v452 = vsel %vm208, %v450, 0.0
    %v453 = vsel %vm208, %v451, 0.0
    %v454 = vadd.f32 %v452, %v453
    %v455 = vrot.slane %v454, 4
    %v456 = vadd.f32 %v454, %v455
    %v457 = vrot.slane %v456, 2
    %v458 = vadd.f32 %v456, %v457
    %v459 = vrot.slane %v458, 1
    %v460 = vadd.f32 %v458, %v459
    %v461 = vmul.f32 %v460, %v218
    %v462 = vadd.f32 %v461, 1e-05
    %v463 = vrsqrt.pop %v462
    %v464 = vmul.f32 %v448, %v463
    %v465 = vmul.f32 %v449, %v463
    %v466 = vld [vmem:[%s5] sm:$0x1]
    %v468 = vlaneseq
    %v469 = vshrl.u32 %v468, 7
    %v470 = vsub.s32 0, %v469
    %v471 = vrot.slane %v466, %v470
    %v473 = vmul.f32 %v464, %v471
    %v474 = vmul.f32 %v465, %v471
    %v475 = vld [vmem:[%s6] sm:$0x1]
    %v477 = vlaneseq
    %v478 = vshrl.u32 %v477, 7
    %v479 = vsub.s32 0, %v478
    %v480 = vrot.slane %v475, %v479
    %v482 = vadd.f32 %v473, %v480
    %v483 = vadd.f32 %v474, %v480
    %vm484 = vcmp.ge.f32.partialorder %v482, 0.0
    %vm485 = vcmp.ge.f32.partialorder %v483, 0.0
    %v486 = vmul.f32 %v482, 0.01
    %v487 = vmul.f32 %v483, 0.01
    %v488 = vsel %vm484, %v482, %v486
    %v489 = vsel %vm485, %v483, %v487
    %vm490 = vcmask 253952
    %491 = vst.msk [vmem:[#allocation4] sm:$0x1] %vm490, %v488
    %v494 = vunpack.c.l.s4 1983009808
    %v495 = vunpack.c.0.s8 %v494
    %v496 = vlaneseq
    %v497 = vshrl.u32 %v496, 7
    %v498 = vsub.s32 %v495, %v497
    %v499 = vrot.slane %v488, %v498
    %v500 = vrot.slane %v499, 7
    %v501 = vrot.slane %v500, 2
    %502 = vrot.lane.b32.xlu0 %v501, 32
    %v503 = vpop.permute.xlu0 %502
    %vm505 = vcmask 516352
    %506 = vst.msk [vmem:[#allocation4] sm:$0x1] %vm505, %v503
    %v507 = vcombine.high %v499, %v499
    %508 = vrot.lane.b32.xlu0 %v507, 64
    %v509 = vpop.permute.xlu0 %508
    %vm511 = vcmask 778752
    %512 = vst.msk [vmem:[#allocation4] sm:$0x1] %vm511, %v509
    %v513 = vrot.slane %v507, 7
    %v514 = vrot.slane %v513, 2
    %515 = vrot.lane.b32.xlu0 %v514, 96
    %v516 = vpop.permute.xlu0 %515
    %vm518 = vcmask 1041152
    %519 = vst.msk [vmem:[#allocation4] sm:$0x1] %vm518, %v516
    %v520 = vcombine.high %v488, %v488
    %v522 = vunpack.c.l.s4 1983009808
    %v523 = vunpack.c.0.s8 %v522
    %v524 = vlaneseq
    %v525 = vshrl.u32 %v524, 7
    %v526 = vsub.s32 %v523, %v525
    %v527 = vrot.slane %v520, %v526
    %529 = vst.msk [vmem:[#allocation4 + $0x2] sm:$0x1] %vm490, %v527
    %v530 = vrot.slane %v527, 7
    %v531 = vrot.slane %v530, 2
    %532 = vrot.lane.b32.xlu0 %v531, 32
    %v533 = vpop.permute.xlu0 %532
    %535 = vst.msk [vmem:[#allocation4 + $0x2] sm:$0x1] %vm505, %v533
    %v536 = vcombine.high %v527, %v527
    %537 = vrot.lane.b32.xlu0 %v536, 64
    %v538 = vpop.permute.xlu0 %537
    %540 = vst.msk [vmem:[#allocation4 + $0x2] sm:$0x1] %vm511, %v538
    %v541 = vrot.slane %v536, 7
    %v542 = vrot.slane %v541, 2
    %543 = vrot.lane.b32.xlu0 %v542, 96
    %v544 = vpop.permute.xlu0 %543
    %546 = vst.msk [vmem:[#allocation4 + $0x2] sm:$0x1] %vm518, %v544
    %547 = vst.msk [vmem:[#allocation4 + $0x1] sm:$0x1] %vm490, %v489
    %v550 = vunpack.c.l.s4 1983009808
    %v551 = vunpack.c.0.s8 %v550
    %v552 = vlaneseq
    %v553 = vshrl.u32 %v552, 7
    %v554 = vsub.s32 %v551, %v553
    %v555 = vrot.slane %v489, %v554
    %v556 = vrot.slane %v555, 7
    %v557 = vrot.slane %v556, 2
    %558 = vrot.lane.b32.xlu0 %v557, 32
    %v559 = vpop.permute.xlu0 %558
    %561 = vst.msk [vmem:[#allocation4 + $0x1] sm:$0x1] %vm505, %v559
    %v562 = vcombine.high %v555, %v555
    %563 = vrot.lane.b32.xlu0 %v562, 64
    %v564 = vpop.permute.xlu0 %563
    %566 = vst.msk [vmem:[#allocation4 + $0x1] sm:$0x1] %vm511, %v564
    %v567 = vrot.slane %v562, 7
    %v568 = vrot.slane %v567, 2
    %569 = vrot.lane.b32.xlu0 %v568, 96
    %v570 = vpop.permute.xlu0 %569
    %572 = vst.msk [vmem:[#allocation4 + $0x1] sm:$0x1] %vm518, %v570
    %v573 = vcombine.high %v489, %v489
    %v575 = vunpack.c.l.s4 1983009808
    %v576 = vunpack.c.0.s8 %v575
    %v577 = vlaneseq
    %v578 = vshrl.u32 %v577, 7
    %v579 = vsub.s32 %v576, %v578
    %v580 = vrot.slane %v573, %v579
    %582 = vst.msk [vmem:[#allocation4 + $0x3] sm:$0x1] %vm490, %v580
    %v583 = vrot.slane %v580, 7
    %v584 = vrot.slane %v583, 2
    %585 = vrot.lane.b32.xlu0 %v584, 32
    %v586 = vpop.permute.xlu0 %585
    %588 = vst.msk [vmem:[#allocation4 + $0x3] sm:$0x1] %vm505, %v586
    %v589 = vcombine.high %v580, %v580
    %590 = vrot.lane.b32.xlu0 %v589, 64
    %v591 = vpop.permute.xlu0 %590
    %593 = vst.msk [vmem:[#allocation4 + $0x3] sm:$0x1] %vm511, %v591
    %v594 = vrot.slane %v589, 7
    %v595 = vrot.slane %v594, 2
    %596 = vrot.lane.b32.xlu0 %v595, 96
    %v597 = vpop.permute.xlu0 %596
    %599 = vst.msk [vmem:[#allocation4 + $0x3] sm:$0x1] %vm518, %v597
    %v600 = vld [vmem:[#allocation4] sm:$0xf]
    %v601 = vld [vmem:[%s7] sm:$0xff]
    %v602 = vld [vmem:[%s7 + $0x8] sm:$0xff]
    %v603 = vld [vmem:[%s7 + $0x10] sm:$0xff]
    %v604 = vld [vmem:[%s7 + $0x18] sm:$0xff]
    %v605 = vld [vmem:[%s7 + $0x20] sm:$0xff]
    %v606 = vld [vmem:[%s7 + $0x28] sm:$0xff]
    %v607 = vld [vmem:[%s7 + $0x30] sm:$0xff]
    %v608 = vld [vmem:[%s7 + $0x38] sm:$0xff]
    %v609 = vld [vmem:[%s7 + $0x40] sm:$0xff]
    %v610 = vld [vmem:[%s7 + $0x48] sm:$0xff]
    %v611 = vld [vmem:[%s7 + $0x50] sm:$0xff]
    %v612 = vld [vmem:[%s7 + $0x58] sm:$0xff]
    %v613 = vld [vmem:[%s7 + $0x60] sm:$0xff]
    %v614 = vld [vmem:[%s7 + $0x68] sm:$0xff]
    %v615 = vld [vmem:[%s7 + $0x70] sm:$0xff]
    %v616 = vld [vmem:[%s7 + $0x78] sm:$0xff]
    %v617 = vld [vmem:[%s7 + $0x80] sm:$0xff]
    %v618 = vld [vmem:[%s7 + $0x88] sm:$0xff]
    %v619 = vld [vmem:[%s7 + $0x90] sm:$0xff]
    %v620 = vld [vmem:[%s7 + $0x98] sm:$0xff]
    %v621 = vld [vmem:[%s7 + $0xa0] sm:$0xff]
    %v622 = vld [vmem:[%s7 + $0xa8] sm:$0xff]
    %v623 = vld [vmem:[%s7 + $0xb0] sm:$0xff]
    %v624 = vld [vmem:[%s7 + $0xb8] sm:$0xff]
    %v625 = vld [vmem:[%s7 + $0xc0] sm:$0xff]
    %v626 = vld [vmem:[%s7 + $0xc8] sm:$0xff]
    %v627 = vld [vmem:[%s7 + $0xd0] sm:$0xff]
    %v628 = vld [vmem:[%s7 + $0xd8] sm:$0xff]
    %v629 = vld [vmem:[%s7 + $0xe0] sm:$0xff]
    %v630 = vld [vmem:[%s7 + $0xe8] sm:$0xff]
    %v631 = vld [vmem:[%s7 + $0xf0] sm:$0xff]
    %v632 = vld [vmem:[%s7 + $0xf8] sm:$0xff]
    %v633 = vld [vmem:[%s8] sm:$0x1]
    %v635 = vlaneseq
    %v636 = vshrl.u32 %v635, 7
    %v637 = vsub.s32 0, %v636
    %v638 = vrot.slane %v633, %v637
    %v642 = vunpack.c.l.s4 1983009808
    %v643 = vunpack.c.0.s8 %v642
    %v644 = vlaneseq
    %v645 = vshrl.u32 %v644, 7
    %v646 = vsub.s32 %v643, %v645
    %v647 = vrot.slane %v600, %v646
    %v648 = vcombine.high %v647, %v647
    %651 = vmatprep.subr.mxu0 0.0
    %652 = vmatpush1.msra.mxu0 %v616
    %653 = vmatprep.subr.mxu0 0.0
    %654 = vmatpush1.msra.mxu0 %v615
    %655 = vmatprep.subr.mxu0 0.0
    %656 = vmatpush1.msra.mxu0 %v614
    %657 = vmatprep.subr.mxu0 0.0
    %658 = vmatpush1.msra.mxu0 %v613
    %659 = vmatprep.subr.mxu0 0.0
    %660 = vmatpush1.msra.mxu0 %v612
    %661 = vmatprep.subr.mxu0 0.0
    %662 = vmatpush1.msra.mxu0 %v611
    %663 = vmatprep.subr.mxu0 0.0
    %664 = vmatpush1.msra.mxu0 %v610
    %665 = vmatprep.subr.mxu0 0.0
    %666 = vmatpush1.msra.mxu0 %v609
    %667 = vmatprep.subr.mxu0 0.0
    %668 = vmatpush1.msra.mxu0 %v608
    %669 = vmatprep.subr.mxu0 0.0
    %670 = vmatpush1.msra.mxu0 %v607
    %671 = vmatprep.subr.mxu0 0.0
    %672 = vmatpush1.msra.mxu0 %v606
    %673 = vmatprep.subr.mxu0 0.0
    %674 = vmatpush1.msra.mxu0 %v605
    %675 = vmatprep.subr.mxu0 0.0
    %676 = vmatpush1.msra.mxu0 %v604
    %677 = vmatprep.subr.mxu0 0.0
    %678 = vmatpush1.msra.mxu0 %v603
    %679 = vmatprep.subr.mxu0 0.0
    %680 = vmatpush1.msra.mxu0 %v602
    %681 = vmatprep.subr.mxu0 0.0
    %682 = vmatpush1.msra.mxu0 %v601
    %683 = vmatprep.subr.mxu0 0.0
    %684 = vmatpush2.msra.mxu0 %v632
    %685 = vmatprep.subr.mxu0 0.0
    %686 = vmatpush2.msra.mxu0 %v631
    %687 = vmatprep.subr.mxu0 0.0
    %688 = vmatpush2.msra.mxu0 %v630
    %689 = vmatprep.subr.mxu0 0.0
    %690 = vmatpush2.msra.mxu0 %v629
    %691 = vmatprep.subr.mxu0 0.0
    %692 = vmatpush2.msra.mxu0 %v628
    %693 = vmatprep.subr.mxu0 0.0
    %694 = vmatpush2.msra.mxu0 %v627
    %695 = vmatprep.subr.mxu0 0.0
    %696 = vmatpush2.msra.mxu0 %v626
    %697 = vmatprep.subr.mxu0 0.0
    %698 = vmatpush2.msra.mxu0 %v625
    %699 = vmatprep.subr.mxu0 0.0
    %700 = vmatpush2.msra.mxu0 %v624
    %701 = vmatprep.subr.mxu0 0.0
    %702 = vmatpush2.msra.mxu0 %v623
    %703 = vmatprep.subr.mxu0 0.0
    %704 = vmatpush2.msra.mxu0 %v622
    %705 = vmatprep.subr.mxu0 0.0
    %706 = vmatpush2.msra.mxu0 %v621
    %707 = vmatprep.subr.mxu0 0.0
    %708 = vmatpush2.msra.mxu0 %v620
    %709 = vmatprep.subr.mxu0 0.0
    %710 = vmatpush2.msra.mxu0 %v619
    %711 = vmatprep.subr.mxu0 0.0
    %712 = vmatpush2.msra.mxu0 %v618
    %713 = vmatprep.subr.mxu0 0.0
    %714 = vmatpush2.msra.mxu0 %v617
    %715 = vmatprep.mubr.f32.mxu0 %v648
    %716 = vmatmul.mubr.f32.gmra.mxu0 %v647
    %v717 = vpop.f32.mrf.mxu0
    %v718 = vadd.f32 %v638, %v717
    %v719 = vpop.f32.mrf.mxu0
    %720 = vdwg.mxu0
    %vm721 = vcmask 58368
    %722 = vst.msk [vmem:[#allocation5] sm:$0x3] %vm721, %v718
    // Predicated region
    $region38: #{cnn_forward.1} parent=1 // pred_check
      _
    $region39: #{cnn_forward.1} parent=1 // pred_check_branch
      %724 = sbr.rel (0) target = $region41
    $region40: #{cnn_forward.1} parent=1 // pred_region
      %s726 = ssub.s32 32, 32
      %727 = vsyncadd [#allocation6], %s726
      %s729 = sshll.u32 [#allocation5], 4
      %s730 = int_to_ptr.vmem [resolvable:$true] %s729
      %732 = dma.vmem_to_hbm [thread:$0]  %s730, 32, %s9, [#allocation6]
    $region41: #{cnn_forward.1} parent=1 // pred_fallthru
      _
    // Predicated region
    $region42: #{cnn_forward.1} parent=1 // pred_check
      _
    $region43: #{cnn_forward.1} parent=1 // pred_check_branch
      %734 = sbr.rel (0) target = $region45
    $region44: #{cnn_forward.1} parent=1 // pred_region
      %735 = dma.done [#allocation6], 32
    $region45: #{cnn_forward.1} parent=1 // pred_fallthru
      _
    %736 = vsyncpa [#allocation6], 1

</llo_original>
